<compile_context>
chip_gen: v7x
topology: tpu7x:2x2x1
jax: 0.10.0
libtpu: 0.0.40
codegen_flags: <defaults>
</compile_context>

<pallas_src>
import functools

import jax
import jax.numpy as jnp
from jax.experimental import pallas as pl
from jax.experimental.pallas import tpu as pltpu

LANE = 128


def _round_up(n, m):
    return ((n + m - 1) // m) * m


def _mlp_kernel(x_ref, w0_ref, w1_ref, w2_ref, b_ref, o_ref, *, W0, W1, out_dim):
    """One batch tile: three fused Linear layers with ReLU between them."""
    # Cast the input to the compute dtype in-kernel (VPU work hidden under the
    # input DMA) rather than as a separate XLA pass over x in HBM.
    x = x_ref[...].astype(w0_ref.dtype)

    # Layer 0: Linear + ReLU (MXU accumulates in f32; bias/ReLU in f32).
    y = jnp.dot(x, w0_ref[...], preferred_element_type=jnp.float32)
    y = jnp.maximum(y + b_ref[0:1, :W0], 0.0)

    # Layer 1: Linear + ReLU.
    y = jnp.dot(y.astype(w1_ref.dtype), w1_ref[...],
                preferred_element_type=jnp.float32)
    y = jnp.maximum(y + b_ref[1:2, :W1], 0.0)

    # Layer 2 (output head): Linear, no activation.  True out_dim columns.
    y = jnp.dot(y.astype(w2_ref.dtype), w2_ref[...],
                preferred_element_type=jnp.float32)
    y = y + b_ref[2:3, :out_dim]
    o_ref[...] = y.astype(o_ref.dtype)


def prepare_mlp_params(params, compute_dtype=jnp.bfloat16):
    """One-time prep (hoisted out of the forward path): lane-pad hidden
    widths to 128, pack the three bias rows into one f32 buffer, and cast the
    weights to the compute dtype.

    params = [(w0, b0), (w1, b1), (w2, b2)] with w_l stored as (in_l, out_l),
    i.e. the transpose of PyTorch's nn.Linear weight.
    """
    (w0, b0), (w1, b1), (w2, b2) = params
    D_in = w0.shape[0]
    out_dim = w2.shape[1]

    # Hidden widths padded to one 128-lane tile (lane-dense intermediates);
    # the output head keeps its true width -- see out_spec in mlp_pallas.
    W0 = _round_up(w0.shape[1], LANE)
    W1 = _round_up(w1.shape[1], LANE)
    maxW = max(W0, W1, _round_up(out_dim, LANE))

    def pad_w(w, rows, cols):
        return jnp.zeros((rows, cols), compute_dtype).at[
            :w.shape[0], :w.shape[1]].set(w.astype(compute_dtype))

    w0p = pad_w(w0, D_in, W0)
    w1p = pad_w(w1, W0, W1)
    w2p = pad_w(w2, W1, out_dim)          # no column padding on the head

    # Pack the three bias rows into one (3, maxW) f32 buffer: one resident DMA
    # instead of three, and bias add / ReLU stay in f32 regardless of cdt.
    bias = jnp.zeros((3, maxW), jnp.float32)
    bias = bias.at[0, :b0.shape[0]].set(b0.astype(jnp.float32))
    bias = bias.at[1, :b1.shape[0]].set(b1.astype(jnp.float32))
    bias = bias.at[2, :b2.shape[0]].set(b2.astype(jnp.float32))

    return {"w0": w0p, "w1": w1p, "w2": w2p, "bias": bias,
            "dims": (D_in, W0, W1, out_dim, maxW)}


def mlp_pallas(x, prep, *, block_m=2048):
    """Fused MLP forward.  `prep` comes from prepare_mlp_params()."""
    w0p, w1p, w2p, bias = prep["w0"], prep["w1"], prep["w2"], prep["bias"]
    D_in, W0, W1, out_dim, maxW = prep["dims"]
    M = x.shape[0]
    assert x.shape[1] == D_in, (x.shape, D_in)
    out_dtype = x.dtype

    # Batch tile: big enough to amortize the ~0.35 us per-grid-step overhead,
    # but clamped to ceil(M/4) (8-row aligned) so there are always >= 4 grid
    # steps -> both v7x TensorCores get work and DMA/compute overlap engages.
    tm_cap = _round_up(max(1, -(-M // 4)), 8)
    tm = max(8, min(block_m, tm_cap))
    grid = (pl.cdiv(M, tm),)

    itemsize = lambda a: a.size * jnp.dtype(a.dtype).itemsize
    flops = 2 * M * (D_in * W0 + W0 * W1 + W1 * out_dim)
    bytes_accessed = (itemsize(x) + itemsize(w0p) + itemsize(w1p)
                      + itemsize(w2p) + itemsize(bias)
                      + M * out_dim * jnp.dtype(out_dtype).itemsize)

    kernel = functools.partial(_mlp_kernel, W0=W0, W1=W1, out_dim=out_dim)

    return pl.pallas_call(
        kernel,
        out_shape=jax.ShapeDtypeStruct((M, out_dim), out_dtype),
        grid_spec=pltpu.PrefetchScalarGridSpec(
            num_scalar_prefetch=0,
            grid=grid,
            in_specs=[
                # x: tiled over the batch (pipelined HBM->VMEM DMA).
                pl.BlockSpec((tm, D_in), lambda i: (i, 0)),
                # Weights / packed biases: grid-invariant resident blocks.
                pl.BlockSpec((D_in, W0), lambda i: (0, 0)),
                pl.BlockSpec((W0, W1), lambda i: (0, 0)),
                pl.BlockSpec((W1, out_dim), lambda i: (0, 0)),
                pl.BlockSpec((3, maxW), lambda i: (0, 0)),
            ],
            # True output width: last block dim == full array dim, so this is
            # legal; no padded slab + wrapper slice (no extra HBM traffic).
            out_specs=pl.BlockSpec((tm, out_dim), lambda i: (i, 0)),
        ),
        compiler_params=pltpu.CompilerParams(
            # Independent batch tiles -> shard across v7x's 2 TensorCores.
            dimension_semantics=("parallel",),
            # Above v5e/v6e scoped defaults, with headroom under v7x's 64 MiB
            # physical per-TC VMEM.
            vmem_limit_bytes=48 * 1024 * 1024,
        ),
        cost_estimate=pl.CostEstimate(flops=flops, transcendentals=0,
                                      bytes_accessed=bytes_accessed),
    )(x, w0p, w1p, w2p, bias)


def init_mlp_params(key, input_dim, output_dim, L=2, dtype=jnp.float32):
    """Deterministic init mimicking nn.Linear's default U(-1/sqrt(fan_in), ...)."""
    dims = [input_dim // (2 ** l) for l in range(L + 1)] + [output_dim]
    params = []
    for l in range(L + 1):
        fan_in, fan_out = dims[l], dims[l + 1]
        key, kw, kb = jax.random.split(key, 3)
        bound = 1.0 / jnp.sqrt(jnp.float32(fan_in))
        # Stored as (in, out): PyTorch's (out, in) weight, transposed.
        w = jax.random.uniform(kw, (fan_in, fan_out), dtype, -bound, bound)
        b = jax.random.uniform(kb, (fan_out,), dtype, -bound, bound)
        params.append((w, b))
    return params


def mlp_reference(x, params):
    """Plain-JAX reference of the PyTorch forward."""
    y = x
    for l, (w, b) in enumerate(params):
        y = y @ w + b
        if l < len(params) - 1:
            y = jnp.maximum(y, 0.0)
    return y


if __name__ == "__main__":
    key = jax.random.PRNGKey(0)
    input_dim, output_dim, L = 32, 4, 2

    kx, kp = jax.random.split(key)
    params = init_mlp_params(kp, input_dim, output_dim, L=L)

    x = jax.random.normal(kx, (256, input_dim), jnp.float32)
    ref = mlp_reference(x, params)

    # (1) Exact f32 path: tm clamps to 64 -> grid=(4,), pipelined + parallel.
    prep_f32 = prepare_mlp_params(params, compute_dtype=jnp.float32)
    out = jax.block_until_ready(mlp_pallas(x, prep_f32))
    assert out.shape == (256, output_dim), out.shape
    assert jnp.allclose(out, ref, atol=1e-5, rtol=1e-5), "f32 mismatch vs reference"

    # (2) Ragged batch (not a multiple of the tile) -> masked final tile.
    x2 = x[:200]
    out2 = jax.block_until_ready(mlp_pallas(x2, prep_f32))
    ref2 = mlp_reference(x2, params)
    assert out2.shape == (200, output_dim), out2.shape
    assert jnp.allclose(out2, ref2, atol=1e-5, rtol=1e-5), "ragged mismatch vs reference"

    # (3) Default bf16 fast path (weights/activations bf16, f32 accumulation).
    #     Note: reduces input precision as well -- intentional (5e-2 tol).
    prep_bf16 = prepare_mlp_params(params)
    out3 = jax.block_until_ready(mlp_pallas(x, prep_bf16))
    assert out3.shape == (256, output_dim), out3.shape
    assert jnp.allclose(out3, ref, atol=5e-2, rtol=5e-2), "bf16 mismatch vs reference"

    print("KERNEL_OK")
</pallas_src>

<mosaic_0001>
module attributes {stable_mosaic.version = 11 : i64} {
  func.func @_mlp_kernel(%arg0: i32, %arg1: memref<64x32xf32, #tpu.memory_space<vmem>>, %arg2: memref<32x128xf32, #tpu.memory_space<vmem>>, %arg3: memref<128x128xf32, #tpu.memory_space<vmem>>, %arg4: memref<128x4xf32, #tpu.memory_space<vmem>>, %arg5: memref<3x128xf32, #tpu.memory_space<vmem>>, %arg6: memref<64x4xf32, #tpu.memory_space<vmem>>) attributes {dimension_semantics = [#tpu.dimension_semantics<parallel>], iteration_bounds = array<i64: 4>, scalar_prefetch = 0 : i64, scratch_operands = 0 : i64, tpu.core_type = #tpu.core_type<tc>, window_params = [{transform_indices = @transform_0, window_bounds = array<i64: 64, 32>}, {pipeline_mode = #tpu.pipeline_mode<synchronous>, transform_indices = @transform_1, window_bounds = array<i64: 32, 128>}, {pipeline_mode = #tpu.pipeline_mode<synchronous>, transform_indices = @transform_2, window_bounds = array<i64: 128, 128>}, {pipeline_mode = #tpu.pipeline_mode<synchronous>, transform_indices = @transform_3, window_bounds = array<i64: 128, 4>}, {pipeline_mode = #tpu.pipeline_mode<synchronous>, transform_indices = @transform_4, window_bounds = array<i64: 3, 128>}, {transform_indices = @transform_5, window_bounds = array<i64: 64, 4>}]} {
    %c0 = arith.constant 0 : index
    %c0_0 = arith.constant 0 : index
    %0 = vector.load %arg1[%c0, %c0_0] : memref<64x32xf32, #tpu.memory_space<vmem>>, vector<64x32xf32>
    %c0_1 = arith.constant 0 : index
    %c0_2 = arith.constant 0 : index
    %1 = vector.load %arg2[%c0_1, %c0_2] : memref<32x128xf32, #tpu.memory_space<vmem>>, vector<32x128xf32>
    %cst = arith.constant dense<0.000000e+00> : vector<64x128xf32>
    %2 = tpu.matmul %0, %1, %cst {dimension_numbers = #tpu.dot_dimension_numbers<[1], [0], [0], [1], [0, 0, 1, 1], [], []>} : vector<64x32xf32>, vector<32x128xf32>, vector<64x128xf32> -> vector<64x128xf32>
    %c0_3 = arith.constant 0 : index
    %c0_4 = arith.constant 0 : index
    %3 = vector.load %arg5[%c0_3, %c0_4] : memref<3x128xf32, #tpu.memory_space<vmem>>, vector<1x128xf32>
    %4 = vector.broadcast %3 : vector<1x128xf32> to vector<64x128xf32>
    %5 = arith.addf %2, %4 : vector<64x128xf32>
    %cst_5 = arith.constant 0.000000e+00 : f32
    %6 = vector.broadcast %cst_5 : f32 to vector<64x128xf32>
    %7 = arith.maximumf %5, %6 : vector<64x128xf32>
    %c0_6 = arith.constant 0 : index
    %c0_7 = arith.constant 0 : index
    %8 = vector.load %arg3[%c0_6, %c0_7] : memref<128x128xf32, #tpu.memory_space<vmem>>, vector<128x128xf32>
    %cst_8 = arith.constant dense<0.000000e+00> : vector<64x128xf32>
    %9 = tpu.matmul %7, %8, %cst_8 {dimension_numbers = #tpu.dot_dimension_numbers<[1], [0], [0], [1], [0, 0, 1, 1], [], []>} : vector<64x128xf32>, vector<128x128xf32>, vector<64x128xf32> -> vector<64x128xf32>
    %c1 = arith.constant 1 : index
    %c0_9 = arith.constant 0 : index
    %10 = vector.load %arg5[%c1, %c0_9] : memref<3x128xf32, #tpu.memory_space<vmem>>, vector<1x128xf32>
    %11 = vector.broadcast %10 : vector<1x128xf32> to vector<64x128xf32>
    %12 = arith.addf %9, %11 : vector<64x128xf32>
    %cst_10 = arith.constant 0.000000e+00 : f32
    %13 = vector.broadcast %cst_10 : f32 to vector<64x128xf32>
    %14 = arith.maximumf %12, %13 : vector<64x128xf32>
    %c0_11 = arith.constant 0 : index
    %c0_12 = arith.constant 0 : index
    %15 = vector.load %arg4[%c0_11, %c0_12] : memref<128x4xf32, #tpu.memory_space<vmem>>, vector<128x4xf32>
    %cst_13 = arith.constant dense<0.000000e+00> : vector<64x4xf32>
    %16 = tpu.matmul %14, %15, %cst_13 {dimension_numbers = #tpu.dot_dimension_numbers<[1], [0], [0], [1], [0, 0, 1, 1], [], []>} : vector<64x128xf32>, vector<128x4xf32>, vector<64x4xf32> -> vector<64x4xf32>
    %c2 = arith.constant 2 : index
    %c0_14 = arith.constant 0 : index
    %17 = vector.load %arg5[%c2, %c0_14] : memref<3x128xf32, #tpu.memory_space<vmem>>, vector<1x4xf32>
    %18 = vector.broadcast %17 : vector<1x4xf32> to vector<64x4xf32>
    %19 = arith.addf %16, %18 : vector<64x4xf32>
    %c0_15 = arith.constant 0 : index
    %c0_16 = arith.constant 0 : index
    %20 = vector.load %arg6[%c0_15, %c0_16] : memref<64x4xf32, #tpu.memory_space<vmem>>, vector<64x4xf32>
    tpu.vector_store %arg6[%c0_15, %c0_16], %19 {strides = array<i32>} : memref<64x4xf32, #tpu.memory_space<vmem>>, vector<64x4xf32>,
    return
  }
  func.func @transform_0(%arg0: i32) -> (i32, i32) {
    %c0_i32 = arith.constant 0 : i32
    %c0_i32_0 = arith.constant 0 : i32
    return %arg0, %c0_i32 : i32, i32
  }
  func.func @transform_1(%arg0: i32) -> (i32, i32) {
    %c0_i32 = arith.constant 0 : i32
    %c0_i32_0 = arith.constant 0 : i32
    %c0_i32_1 = arith.constant 0 : i32
    return %c0_i32, %c0_i32_0 : i32, i32
  }
  func.func @transform_2(%arg0: i32) -> (i32, i32) {
    %c0_i32 = arith.constant 0 : i32
    %c0_i32_0 = arith.constant 0 : i32
    %c0_i32_1 = arith.constant 0 : i32
    return %c0_i32, %c0_i32_0 : i32, i32
  }
  func.func @transform_3(%arg0: i32) -> (i32, i32) {
    %c0_i32 = arith.constant 0 : i32
    %c0_i32_0 = arith.constant 0 : i32
    %c0_i32_1 = arith.constant 0 : i32
    return %c0_i32, %c0_i32_0 : i32, i32
  }
  func.func @transform_4(%arg0: i32) -> (i32, i32) {
    %c0_i32 = arith.constant 0 : i32
    %c0_i32_0 = arith.constant 0 : i32
    %c0_i32_1 = arith.constant 0 : i32
    return %c0_i32, %c0_i32_0 : i32, i32
  }
  func.func @transform_5(%arg0: i32) -> (i32, i32) {
    %c0_i32 = arith.constant 0 : i32
    %c0_i32_0 = arith.constant 0 : i32
    return %arg0, %c0_i32 : i32, i32
  }
}

</mosaic_0001>

<llo_original>
// kernel: tpu_custom_call.1
$region0: #{tpu_custom_call.1}
  #allocation0 [shape = 'u32[]', space=smem, size = 0x4, offset = 0x4, fixed_abs, tag = 'smem constant byte address 0x4 - core index']
  #allocation1 [shape = 'u32[144,128]{1,0:T(1,128)}', space=vmem, size = 0x12000, scoped, tag = 'internal scratch']
  %s0 = inlined_call_operand.vmem [shape: f32[256,32], index: 0, kind: input, shape index: {}]
  %s1 = inlined_call_operand.vmem [shape: f32[32,128], index: 1, kind: input, shape index: {}]
  %s2 = inlined_call_operand.vmem [shape: f32[128,128], index: 2, kind: input, shape index: {}]
  %s3 = inlined_call_operand.vmem [shape: f32[128,4], index: 3, kind: input, shape index: {}]
  %s4 = inlined_call_operand.vmem [shape: f32[3,128], index: 4, kind: input, shape index: {}]
  %s5 = inlined_call_operand.vmem [shape: f32[256,4], index: 5, kind: output, shape index: {}]
  %s6 = sld [smem:[#allocation0]]
  $region53: #{tpu_custom_call.1} parent=0
    _
  %s8 = ssub.s32 1, %s6
  %s9 = scalar_select 0, %s8, %s6
  loop: start=0, step=1, limit=6
  $region2: #{tpu_custom_call.1} parent=0 // loop_pre_header
    _
  $region3: #{tpu_custom_call.1} parent=0 // loop_header
    %s11 = sphi 0, %s15
    %p12 = scmp.ge.s32.totalorder %s11, 6
    %s21 = sphi 0, %s23
    %s24 = sphi 0, %s21
    %s25 = sphi 0, %s24
    %s41 = sphi 0, %s25
    %s45 = sphi 0, %s45
    %s47 = sphi 0, %s45
    %s48 = sphi 0, %s47
    %s62 = sphi 0, %s48
    %s66 = sphi 0, %s66
    %s68 = sphi 0, %s66
    %s69 = sphi 0, %s68
    %s83 = sphi 0, %s69
    %s87 = sphi 0, %s87
    %s89 = sphi 0, %s87
    %s90 = sphi 0, %s89
    %s104 = sphi 0, %s90
    %s108 = sphi 0, %s108
    %s110 = sphi 0, %s108
    %s111 = sphi 0, %s110
    %s125 = sphi 0, %s111
    %s131 = sphi 0, %s133
    %s134 = sphi 0, %s131
    %s135 = sphi 0, %s134
    %s151 = sphi 0, %s135
  $region4: #{tpu_custom_call.1} parent=0 // loop_header_branch
    %14 = sbr.rel (%p12) target = $region8
  $region5: #{tpu_custom_call.1} parent=0 // loop_body
    %s16 = ssub.s32 %s11, 1
    %s17 = ssub.s32 %s11, 2
    %s18 = sadd.s32 %s11, 1
    %s19 = ssub.s32 %s11, %s18
    %p20 = scmp.eq.s32.totalorder %s19, 0
    %s22 = sadd.s32 %s21, 1
    %s23 = scalar_select %p20, %s21, %s22
    %p26 = pneg %p20
    %p27 = scmp.eq.s32.totalorder %s11, 3
    %p28 = por %p26, %p27
    %p29 = scmp.ne.s32.totalorder %s21, %s24
    %p30 = scmp.eq.s32.totalorder %s11, 0
    %p31 = por %p29, %p30
    %p32 = scmp.ne.s32.totalorder %s21, %s24
    %p33 = scmp.eq.s32.totalorder %s16, 3
    %p34 = por %p32, %p33
    %p35 = scmp.ne.s32.totalorder %s24, %s25
    %p36 = scmp.eq.s32.totalorder %s16, 0
    %p37 = por %p35, %p36
    %p38 = scmp.ne.s32.totalorder %s24, %s25
    %p39 = scmp.eq.s32.totalorder %s17, 3
    %p40 = por %p38, %p39
    %p42 = scmp.ne.s32.totalorder %s25, %s41
    %p43 = scmp.eq.s32.totalorder %s17, 0
    %p44 = por %p42, %p43
    %s46 = sadd.s32 %s45, 1
    %p49 = scmp.eq.s32.totalorder %s11, 3
    %p50 = scmp.ne.s32.totalorder %s45, %s47
    %p51 = scmp.eq.s32.totalorder %s11, 0
    %p52 = por %p50, %p51
    %p53 = scmp.ne.s32.totalorder %s45, %s47
    %p54 = scmp.eq.s32.totalorder %s16, 3
    %p55 = por %p53, %p54
    %p56 = scmp.ne.s32.totalorder %s47, %s48
    %p57 = scmp.eq.s32.totalorder %s16, 0
    %p58 = por %p56, %p57
    %p59 = scmp.ne.s32.totalorder %s47, %s48
    %p60 = scmp.eq.s32.totalorder %s17, 3
    %p61 = por %p59, %p60
    %p63 = scmp.ne.s32.totalorder %s48, %s62
    %p64 = scmp.eq.s32.totalorder %s17, 0
    %p65 = por %p63, %p64
    %s67 = sadd.s32 %s66, 1
    %p70 = scmp.eq.s32.totalorder %s11, 3
    %p71 = scmp.ne.s32.totalorder %s66, %s68
    %p72 = scmp.eq.s32.totalorder %s11, 0
    %p73 = por %p71, %p72
    %p74 = scmp.ne.s32.totalorder %s66, %s68
    %p75 = scmp.eq.s32.totalorder %s16, 3
    %p76 = por %p74, %p75
    %p77 = scmp.ne.s32.totalorder %s68, %s69
    %p78 = scmp.eq.s32.totalorder %s16, 0
    %p79 = por %p77, %p78
    %p80 = scmp.ne.s32.totalorder %s68, %s69
    %p81 = scmp.eq.s32.totalorder %s17, 3
    %p82 = por %p80, %p81
    %p84 = scmp.ne.s32.totalorder %s69, %s83
    %p85 = scmp.eq.s32.totalorder %s17, 0
    %p86 = por %p84, %p85
    %s88 = sadd.s32 %s87, 1
    %p91 = scmp.eq.s32.totalorder %s11, 3
    %p92 = scmp.ne.s32.totalorder %s87, %s89
    %p93 = scmp.eq.s32.totalorder %s11, 0
    %p94 = por %p92, %p93
    %p95 = scmp.ne.s32.totalorder %s87, %s89
    %p96 = scmp.eq.s32.totalorder %s16, 3
    %p97 = por %p95, %p96
    %p98 = scmp.ne.s32.totalorder %s89, %s90
    %p99 = scmp.eq.s32.totalorder %s16, 0
    %p100 = por %p98, %p99
    %p101 = scmp.ne.s32.totalorder %s89, %s90
    %p102 = scmp.eq.s32.totalorder %s17, 3
    %p103 = por %p101, %p102
    %p105 = scmp.ne.s32.totalorder %s90, %s104
    %p106 = scmp.eq.s32.totalorder %s17, 0
    %p107 = por %p105, %p106
    %s109 = sadd.s32 %s108, 1
    %p112 = scmp.eq.s32.totalorder %s11, 3
    %p113 = scmp.ne.s32.totalorder %s108, %s110
    %p114 = scmp.eq.s32.totalorder %s11, 0
    %p115 = por %p113, %p114
    %p116 = scmp.ne.s32.totalorder %s108, %s110
    %p117 = scmp.eq.s32.totalorder %s16, 3
    %p118 = por %p116, %p117
    %p119 = scmp.ne.s32.totalorder %s110, %s111
    %p120 = scmp.eq.s32.totalorder %s16, 0
    %p121 = por %p119, %p120
    %p122 = scmp.ne.s32.totalorder %s110, %s111
    %p123 = scmp.eq.s32.totalorder %s17, 3
    %p124 = por %p122, %p123
    %p126 = scmp.ne.s32.totalorder %s111, %s125
    %p127 = scmp.eq.s32.totalorder %s17, 0
    %p128 = por %p126, %p127
    %s129 = ssub.s32 %s11, %s18
    %p130 = scmp.eq.s32.totalorder %s129, 0
    %s132 = sadd.s32 %s131, 1
    %s133 = scalar_select %p130, %s131, %s132
    %p136 = pneg %p130
    %p137 = scmp.eq.s32.totalorder %s11, 3
    %p138 = por %p136, %p137
    %p139 = scmp.ne.s32.totalorder %s131, %s134
    %p140 = scmp.eq.s32.totalorder %s11, 0
    %p141 = por %p139, %p140
    %p142 = scmp.ne.s32.totalorder %s131, %s134
    %p143 = scmp.eq.s32.totalorder %s16, 3
    %p144 = por %p142, %p143
    %p145 = scmp.ne.s32.totalorder %s134, %s135
    %p146 = scmp.eq.s32.totalorder %s16, 0
    %p147 = por %p145, %p146
    %p148 = scmp.ne.s32.totalorder %s134, %s135
    %p149 = scmp.eq.s32.totalorder %s17, 3
    %p150 = por %p148, %p149
    %p152 = scmp.ne.s32.totalorder %s135, %s151
    %p153 = scmp.eq.s32.totalorder %s17, 0
    %p154 = por %p152, %p153
    %p155 = scmp.le.s32.totalorder 1, %s11
    %p156 = scmp.lt.s32.totalorder %s11, 5
    %p157 = pnand %p155, %p156
    %p158 = pneg %p157
    // Predicated region
    $region9: #{tpu_custom_call.1} parent=5 // pred_check
      _
    $region10: #{tpu_custom_call.1} parent=5 // pred_check_branch
      %160 = sbr.rel (%p157) target = $region12
    $region11: #{tpu_custom_call.1} parent=5 // pred_region
      %s161 = ssub.s32 %s11, 1
      // Predicated region
      $region13: #{tpu_custom_call.1} parent=11 // pred_check
        %p162 = pneg %p58
      $region14: #{tpu_custom_call.1} parent=11 // pred_check_branch
        %164 = sbr.rel (%p162) target = $region16
      $region15: #{tpu_custom_call.1} parent=11 // pred_region
        _
      $region16: #{tpu_custom_call.1} parent=11 // pred_fallthru
        _
      // Predicated region
      $region17: #{tpu_custom_call.1} parent=11 // pred_check
        %p165 = pneg %p79
      $region18: #{tpu_custom_call.1} parent=11 // pred_check_branch
        %167 = sbr.rel (%p165) target = $region20
      $region19: #{tpu_custom_call.1} parent=11 // pred_region
        _
      $region20: #{tpu_custom_call.1} parent=11 // pred_fallthru
        _
      // Predicated region
      $region21: #{tpu_custom_call.1} parent=11 // pred_check
        %p168 = pneg %p100
      $region22: #{tpu_custom_call.1} parent=11 // pred_check_branch
        %170 = sbr.rel (%p168) target = $region24
      $region23: #{tpu_custom_call.1} parent=11 // pred_region
        _
      $region24: #{tpu_custom_call.1} parent=11 // pred_fallthru
        _
      // Predicated region
      $region25: #{tpu_custom_call.1} parent=11 // pred_check
        %p171 = pneg %p121
      $region26: #{tpu_custom_call.1} parent=11 // pred_check_branch
        %173 = sbr.rel (%p171) target = $region28
      $region27: #{tpu_custom_call.1} parent=11 // pred_region
        _
      $region28: #{tpu_custom_call.1} parent=11 // pred_fallthru
        _
    $region12: #{tpu_custom_call.1} parent=5 // pred_fallthru
      _
    %p174 = scmp.lt.s32.totalorder %s11, 4
    // Predicated region
    $region29: #{tpu_custom_call.1} parent=5 // pred_check
      %p175 = pneg %p174
    $region30: #{tpu_custom_call.1} parent=5 // pred_check_branch
      %177 = sbr.rel (%p175) target = $region32
    $region31: #{tpu_custom_call.1} parent=5 // pred_region
      // Predicated region
      $region33: #{tpu_custom_call.1} parent=31 // pred_check
        %p178 = pneg %p31
      $region34: #{tpu_custom_call.1} parent=31 // pred_check_branch
        %180 = sbr.rel (%p178) target = $region36
      $region35: #{tpu_custom_call.1} parent=31 // pred_region
        %s181 = smul.u32 8, %s11
        %p182 = scmp.lt.s32.totalorder %s181, 31
        %s183 = scalar_select %p182, %s181, 31
        %s184 = smul.addr %s183, 8
        %s185 = scalar_lea.vmem %s0, %s184
        %s186 = smul.u32 8, %s11
      $region36: #{tpu_custom_call.1} parent=31 // pred_fallthru
        _
    $region32: #{tpu_custom_call.1} parent=5 // pred_fallthru
      _
    %p187 = scmp.le.s32.totalorder 1, %s11
    %p188 = scmp.lt.s32.totalorder %s11, 5
    %p189 = pnand %p187, %p188
    %p190 = pneg %p189
    // Predicated region
    $region37: #{tpu_custom_call.1} parent=5 // pred_check
      _
    $region38: #{tpu_custom_call.1} parent=5 // pred_check_branch
      %192 = sbr.rel (%p189) target = $region40
    $region39: #{tpu_custom_call.1} parent=5 // pred_region
      %s193 = ssub.s32 %s11, 1
      %s194 = smul.u32 8, %s16
      %p195 = scmp.lt.s32.totalorder %s194, 31
      %s196 = scalar_select %p195, %s194, 31
      %s197 = smul.addr %s196, 8
      %s198 = scalar_lea.vmem %s0, %s197
      %p199 = pneg %p37
      %p200 = pneg %p34
      %p201 = pneg %p58
      %p202 = pneg %p55
      %p203 = pneg %p79
      %p204 = pneg %p76
      %p205 = pneg %p100
      %p206 = pneg %p97
      %p207 = pneg %p121
      %p208 = pneg %p118
      %p209 = pneg %p147
      %p210 = pneg %p144
      %s211 = smul.u32 8, %s16
      %p212 = scmp.lt.s32.totalorder %s211, 31
      %s213 = scalar_select %p212, %s211, 31
      %s214 = smul.addr %s213, 8
      %s215 = scalar_lea.vmem %s5, %s214
      %s216 = smul.u32 8, %s16
      %p217 = scmp.lt.s32.totalorder %s216, 31
      %s218 = scalar_select %p217, %s216, 31
      %s219 = smul.addr %s218, 8
      %s220 = scalar_lea.vmem %s0, %s219
      %s221 = smul.u32 8, %s16
      %s222 = smul.u32 8, %s16
      %p223 = scmp.lt.s32.totalorder %s222, 31
      %s224 = scalar_select %p223, %s222, 31
      %s225 = smul.addr %s224, 8
      %s226 = scalar_lea.vmem %s5, %s225
      %s227 = smul.u32 8, %s16
      %v228 = vld [vmem:[%s220] sm:$0xff]
      %v229 = vld [vmem:[%s220 + $0x8] sm:$0xff]
      %v230 = vld [vmem:[%s220 + $0x10] sm:$0xff]
      %v231 = vld [vmem:[%s220 + $0x18] sm:$0xff]
      %v232 = vld [vmem:[%s220 + $0x20] sm:$0xff]
      %v233 = vld [vmem:[%s220 + $0x28] sm:$0xff]
      %v234 = vld [vmem:[%s220 + $0x30] sm:$0xff]
      %v235 = vld [vmem:[%s220 + $0x38] sm:$0xff]
      %v236 = vld [vmem:[%s1] sm:$0xff]
      %v237 = vld [vmem:[%s1 + $0x8] sm:$0xff]
      %v238 = vld [vmem:[%s1 + $0x10] sm:$0xff]
      %v239 = vld [vmem:[%s1 + $0x18] sm:$0xff]
      %v240 = vld [vmem:[%s4] sm:$0x1]
      %v241 = vlaneseq
      %v242 = vshrl.u32 %v241, 7
      %v243 = vsub.s32 0, %v242
      %v244 = vrot.slane %v240, %v243
      %vm245 = vcmask 261120
      %v247 = vsel %vm245, %v228, 0
      %v250 = vsel %vm245, %v229, 0
      %v253 = vsel %vm245, %v230, 0
      %v256 = vsel %vm245, %v231, 0
      %v259 = vsel %vm245, %v232, 0
      %v262 = vsel %vm245, %v233, 0
      %v265 = vsel %vm245, %v234, 0
      %v268 = vsel %vm245, %v235, 0
      %270 = vmatprep.subr.mxu0 0.0
      %271 = vmatpush1.msra.mxu0 %v236
      %272 = vmatprep.subr.mxu0 0.0
      %273 = vmatpush1.msra.mxu0 %v237
      %274 = vmatprep.subr.mxu0 0.0
      %275 = vmatpush1.msra.mxu0 %v238
      %276 = vmatprep.subr.mxu0 0.0
      %277 = vmatpush1.msra.mxu0 %v239
      %278 = vmatprep.subr.mxu0 0.0
      %279 = vmatpush1.msra.mxu0 0.0
      %280 = vmatprep.subr.mxu0 0.0
      %281 = vmatpush1.msra.mxu0 0.0
      %282 = vmatprep.subr.mxu0 0.0
      %283 = vmatpush1.msra.mxu0 0.0
      %284 = vmatprep.subr.mxu0 0.0
      %285 = vmatpush1.msra.mxu0 0.0
      %286 = vmatprep.subr.mxu0 0.0
      %287 = vmatpush1.msra.mxu0 0.0
      %288 = vmatprep.subr.mxu0 0.0
      %289 = vmatpush1.msra.mxu0 0.0
      %290 = vmatprep.subr.mxu0 0.0
      %291 = vmatpush1.msra.mxu0 0.0
      %292 = vmatprep.subr.mxu0 0.0
      %293 = vmatpush1.msra.mxu0 0.0
      %294 = vmatprep.subr.mxu0 0.0
      %295 = vmatpush1.msra.mxu0 0.0
      %296 = vmatprep.subr.mxu0 0.0
      %297 = vmatpush1.msra.mxu0 0.0
      %298 = vmatprep.subr.mxu0 0.0
      %299 = vmatpush1.msra.mxu0 0.0
      %300 = vmatprep.subr.mxu0 0.0
      %301 = vmatpush1.msra.mxu0 0.0
      %302 = vmatprep.subr.mxu0 0.0
      %303 = vmatpush1.msra.mxu0 0.0
      %304 = vmatprep.subr.mxu0 0.0
      %305 = vmatpush1.msra.mxu0 0.0
      %306 = vmatprep.subr.mxu0 0.0
      %307 = vmatpush1.msra.mxu0 0.0
      %308 = vmatprep.subr.mxu0 0.0
      %309 = vmatpush1.msra.mxu0 0.0
      %310 = vmatprep.subr.mxu0 0.0
      %311 = vmatpush1.msra.mxu0 0.0
      %312 = vmatprep.subr.mxu0 0.0
      %313 = vmatpush1.msra.mxu0 0.0
      %314 = vmatprep.subr.mxu0 0.0
      %315 = vmatpush1.msra.mxu0 0.0
      %316 = vmatprep.subr.mxu0 0.0
      %317 = vmatpush1.msra.mxu0 0.0
      %318 = vmatprep.subr.mxu0 0.0
      %319 = vmatpush1.msra.mxu0 0.0
      %320 = vmatprep.subr.mxu0 0.0
      %321 = vmatpush1.msra.mxu0 0.0
      %322 = vmatprep.subr.mxu0 0.0
      %323 = vmatpush1.msra.mxu0 0.0
      %324 = vmatprep.subr.mxu0 0.0
      %325 = vmatpush1.msra.mxu0 0.0
      %326 = vmatprep.subr.mxu0 0.0
      %327 = vmatpush1.msra.mxu0 0.0
      %328 = vmatprep.subr.mxu0 0.0
      %329 = vmatpush1.msra.mxu0 0.0
      %330 = vmatprep.subr.mxu0 0.0
      %331 = vmatpush1.msra.mxu0 0.0
      %332 = vmatprep.subr.mxu0 0.0
      %333 = vmatpush1.msra.mxu0 0.0
      %334 = vmatprep.mubr.f32.mxu0 0.0
      %335 = vmatmul.mubr.f32.gmra.mrb[0].mxu0 %v247
      %v336 = vpop.f32.mrb[0].mxu0
      %v337 = vadd.f32 %v244, %v336
      %v338 = vpop.f32.mrb[0].mxu0
      %339 = vmatprep.mubr.f32.mxu0 0.0
      %340 = vmatmul.mubr.f32.gmra.mrb[0].mxu0 %v250
      %v341 = vpop.f32.mrb[0].mxu0
      %v342 = vadd.f32 %v244, %v341
      %v343 = vpop.f32.mrb[0].mxu0
      %344 = vmatprep.mubr.f32.mxu0 0.0
      %345 = vmatmul.mubr.f32.gmra.mrb[0].mxu0 %v253
      %v346 = vpop.f32.mrb[0].mxu0
      %v347 = vadd.f32 %v244, %v346
      %v348 = vpop.f32.mrb[0].mxu0
      %349 = vmatprep.mubr.f32.mxu0 0.0
      %350 = vmatmul.mubr.f32.gmra.mrb[0].mxu0 %v256
      %v351 = vpop.f32.mrb[0].mxu0
      %v352 = vadd.f32 %v244, %v351
      %v353 = vpop.f32.mrb[0].mxu0
      %354 = vmatprep.mubr.f32.mxu0 0.0
      %355 = vmatmul.mubr.f32.gmra.mrb[0].mxu0 %v259
      %v356 = vpop.f32.mrb[0].mxu0
      %v357 = vadd.f32 %v244, %v356
      %v358 = vpop.f32.mrb[0].mxu0
      %359 = vmatprep.mubr.f32.mxu0 0.0
      %360 = vmatmul.mubr.f32.gmra.mrb[0].mxu0 %v262
      %v361 = vpop.f32.mrb[0].mxu0
      %v362 = vadd.f32 %v244, %v361
      %v363 = vpop.f32.mrb[0].mxu0
      %364 = vmatprep.mubr.f32.mxu0 0.0
      %365 = vmatmul.mubr.f32.gmra.mrb[0].mxu0 %v265
      %v366 = vpop.f32.mrb[0].mxu0
      %v367 = vadd.f32 %v244, %v366
      %v368 = vpop.f32.mrb[0].mxu0
      %369 = vmatprep.mubr.f32.mxu0 0.0
      %370 = vmatmul.mubr.f32.gmra.mrb[0].mxu0 %v268
      %v371 = vpop.f32.mrb[0].mxu0
      %v372 = vadd.f32 %v244, %v371
      %v373 = vpop.f32.mrb[0].mxu0
      %374 = vdwg.mxu0
      %v375 = vmax.f32 %v337, 0.0
      %v376 = vmax.f32 %v342, 0.0
      %v377 = vmax.f32 %v347, 0.0
      %v378 = vmax.f32 %v352, 0.0
      %v379 = vmax.f32 %v357, 0.0
      %v380 = vmax.f32 %v362, 0.0
      %v381 = vmax.f32 %v367, 0.0
      %v382 = vmax.f32 %v372, 0.0
      %v383 = vld [vmem:[%s2] sm:$0xff]
      %v384 = vld [vmem:[%s2 + $0x8] sm:$0xff]
      %v385 = vld [vmem:[%s2 + $0x10] sm:$0xff]
      %v386 = vld [vmem:[%s2 + $0x18] sm:$0xff]
      %v387 = vld [vmem:[%s2 + $0x20] sm:$0xff]
      %v388 = vld [vmem:[%s2 + $0x28] sm:$0xff]
      %v389 = vld [vmem:[%s2 + $0x30] sm:$0xff]
      %v390 = vld [vmem:[%s2 + $0x38] sm:$0xff]
      %v391 = vld [vmem:[%s2 + $0x40] sm:$0xff]
      %v392 = vld [vmem:[%s2 + $0x48] sm:$0xff]
      %v393 = vld [vmem:[%s2 + $0x50] sm:$0xff]
      %v394 = vld [vmem:[%s2 + $0x58] sm:$0xff]
      %v395 = vld [vmem:[%s2 + $0x60] sm:$0xff]
      %v396 = vld [vmem:[%s2 + $0x68] sm:$0xff]
      %v397 = vld [vmem:[%s2 + $0x70] sm:$0xff]
      %v398 = vld [vmem:[%s2 + $0x78] sm:$0xff]
      %v399 = vld [vmem:[%s4 + $0x1] sm:$0x1]
      %v400 = vlaneseq
      %v401 = vshrl.u32 %v400, 7
      %v402 = vsub.s32 0, %v401
      %v403 = vrot.slane %v399, %v402
      %404 = vmatprep.subr.mxu0 0.0
      %405 = vmatpush1.msra.mxu0 %v383
      %406 = vmatprep.subr.mxu0 0.0
      %407 = vmatpush1.msra.mxu0 %v384
      %408 = vmatprep.subr.mxu0 0.0
      %409 = vmatpush1.msra.mxu0 %v385
      %410 = vmatprep.subr.mxu0 0.0
      %411 = vmatpush1.msra.mxu0 %v386
      %412 = vmatprep.subr.mxu0 0.0
      %413 = vmatpush1.msra.mxu0 %v387
      %414 = vmatprep.subr.mxu0 0.0
      %415 = vmatpush1.msra.mxu0 %v388
      %416 = vmatprep.subr.mxu0 0.0
      %417 = vmatpush1.msra.mxu0 %v389
      %418 = vmatprep.subr.mxu0 0.0
      %419 = vmatpush1.msra.mxu0 %v390
      %420 = vmatprep.subr.mxu0 0.0
      %421 = vmatpush1.msra.mxu0 %v391
      %422 = vmatprep.subr.mxu0 0.0
      %423 = vmatpush1.msra.mxu0 %v392
      %424 = vmatprep.subr.mxu0 0.0
      %425 = vmatpush1.msra.mxu0 %v393
      %426 = vmatprep.subr.mxu0 0.0
      %427 = vmatpush1.msra.mxu0 %v394
      %428 = vmatprep.subr.mxu0 0.0
      %429 = vmatpush1.msra.mxu0 %v395
      %430 = vmatprep.subr.mxu0 0.0
      %431 = vmatpush1.msra.mxu0 %v396
      %432 = vmatprep.subr.mxu0 0.0
      %433 = vmatpush1.msra.mxu0 %v397
      %434 = vmatprep.subr.mxu0 0.0
      %435 = vmatpush1.msra.mxu0 %v398
      %436 = vmatprep.subr.mxu0 0.0
      %437 = vmatpush1.msra.mxu0 0.0
      %438 = vmatprep.subr.mxu0 0.0
      %439 = vmatpush1.msra.mxu0 0.0
      %440 = vmatprep.subr.mxu0 0.0
      %441 = vmatpush1.msra.mxu0 0.0
      %442 = vmatprep.subr.mxu0 0.0
      %443 = vmatpush1.msra.mxu0 0.0
      %444 = vmatprep.subr.mxu0 0.0
      %445 = vmatpush1.msra.mxu0 0.0
      %446 = vmatprep.subr.mxu0 0.0
      %447 = vmatpush1.msra.mxu0 0.0
      %448 = vmatprep.subr.mxu0 0.0
      %449 = vmatpush1.msra.mxu0 0.0
      %450 = vmatprep.subr.mxu0 0.0
      %451 = vmatpush1.msra.mxu0 0.0
      %452 = vmatprep.subr.mxu0 0.0
      %453 = vmatpush1.msra.mxu0 0.0
      %454 = vmatprep.subr.mxu0 0.0
      %455 = vmatpush1.msra.mxu0 0.0
      %456 = vmatprep.subr.mxu0 0.0
      %457 = vmatpush1.msra.mxu0 0.0
      %458 = vmatprep.subr.mxu0 0.0
      %459 = vmatpush1.msra.mxu0 0.0
      %460 = vmatprep.subr.mxu0 0.0
      %461 = vmatpush1.msra.mxu0 0.0
      %462 = vmatprep.subr.mxu0 0.0
      %463 = vmatpush1.msra.mxu0 0.0
      %464 = vmatprep.subr.mxu0 0.0
      %465 = vmatpush1.msra.mxu0 0.0
      %466 = vmatprep.subr.mxu0 0.0
      %467 = vmatpush1.msra.mxu0 0.0
      %468 = vmatprep.mubr.f32.mxu0 0.0
      %469 = vmatmul.mubr.f32.gmra.mrb[0].mxu0 %v375
      %v470 = vpop.f32.mrb[0].mxu0
      %v471 = vadd.f32 %v403, %v470
      %v472 = vpop.f32.mrb[0].mxu0
      %473 = vmatprep.mubr.f32.mxu0 0.0
      %474 = vmatmul.mubr.f32.gmra.mrb[0].mxu0 %v376
      %v475 = vpop.f32.mrb[0].mxu0
      %v476 = vadd.f32 %v403, %v475
      %v477 = vpop.f32.mrb[0].mxu0
      %478 = vmatprep.mubr.f32.mxu0 0.0
      %479 = vmatmul.mubr.f32.gmra.mrb[0].mxu0 %v377
      %v480 = vpop.f32.mrb[0].mxu0
      %v481 = vadd.f32 %v403, %v480
      %v482 = vpop.f32.mrb[0].mxu0
      %483 = vmatprep.mubr.f32.mxu0 0.0
      %484 = vmatmul.mubr.f32.gmra.mrb[0].mxu0 %v378
      %v485 = vpop.f32.mrb[0].mxu0
      %v486 = vadd.f32 %v403, %v485
      %v487 = vpop.f32.mrb[0].mxu0
      %488 = vmatprep.mubr.f32.mxu0 0.0
      %489 = vmatmul.mubr.f32.gmra.mrb[0].mxu0 %v379
      %v490 = vpop.f32.mrb[0].mxu0
      %v491 = vadd.f32 %v403, %v490
      %v492 = vpop.f32.mrb[0].mxu0
      %493 = vmatprep.mubr.f32.mxu0 0.0
      %494 = vmatmul.mubr.f32.gmra.mrb[0].mxu0 %v380
      %v495 = vpop.f32.mrb[0].mxu0
      %v496 = vadd.f32 %v403, %v495
      %v497 = vpop.f32.mrb[0].mxu0
      %498 = vmatprep.mubr.f32.mxu0 0.0
      %499 = vmatmul.mubr.f32.gmra.mrb[0].mxu0 %v381
      %v500 = vpop.f32.mrb[0].mxu0
      %v501 = vadd.f32 %v403, %v500
      %v502 = vpop.f32.mrb[0].mxu0
      %503 = vmatprep.mubr.f32.mxu0 0.0
      %504 = vmatmul.mubr.f32.gmra.mrb[0].mxu0 %v382
      %v505 = vpop.f32.mrb[0].mxu0
      %v506 = vadd.f32 %v403, %v505
      %v507 = vpop.f32.mrb[0].mxu0
      %508 = vdwg.mxu0
      %v509 = vmax.f32 %v471, 0.0
      %v510 = vmax.f32 %v476, 0.0
      %v511 = vmax.f32 %v481, 0.0
      %v512 = vmax.f32 %v486, 0.0
      %v513 = vmax.f32 %v491, 0.0
      %v514 = vmax.f32 %v496, 0.0
      %v515 = vmax.f32 %v501, 0.0
      %v516 = vmax.f32 %v506, 0.0
      %v517 = vld [vmem:[%s3] sm:$0xff]
      %v518 = vld [vmem:[%s3 + $0x8] sm:$0xff]
      %v519 = vld [vmem:[%s3 + $0x10] sm:$0xff]
      %v520 = vld [vmem:[%s3 + $0x18] sm:$0xff]
      %v521 = vld [vmem:[%s3 + $0x20] sm:$0xff]
      %v522 = vld [vmem:[%s3 + $0x28] sm:$0xff]
      %v523 = vld [vmem:[%s3 + $0x30] sm:$0xff]
      %v524 = vld [vmem:[%s3 + $0x38] sm:$0xff]
      %v525 = vld [vmem:[%s3 + $0x40] sm:$0xff]
      %v526 = vld [vmem:[%s3 + $0x48] sm:$0xff]
      %v527 = vld [vmem:[%s3 + $0x50] sm:$0xff]
      %v528 = vld [vmem:[%s3 + $0x58] sm:$0xff]
      %v529 = vld [vmem:[%s3 + $0x60] sm:$0xff]
      %v530 = vld [vmem:[%s3 + $0x68] sm:$0xff]
      %v531 = vld [vmem:[%s3 + $0x70] sm:$0xff]
      %v532 = vld [vmem:[%s3 + $0x78] sm:$0xff]
      %v533 = vld [vmem:[%s4 + $0x2] sm:$0x1]
      %v534 = vlaneseq
      %v535 = vshrl.u32 %v534, 7
      %v536 = vsub.s32 0, %v535
      %v537 = vrot.slane %v533, %v536
      %538 = vmatprep.subr.mxu0 0.0
      %539 = vmatpush1.msra.mxu0 %v517
      %540 = vmatprep.subr.mxu0 0.0
      %541 = vmatpush1.msra.mxu0 %v518
      %542 = vmatprep.subr.mxu0 0.0
      %543 = vmatpush1.msra.mxu0 %v519
      %544 = vmatprep.subr.mxu0 0.0
      %545 = vmatpush1.msra.mxu0 %v520
      %546 = vmatprep.subr.mxu0 0.0
      %547 = vmatpush1.msra.mxu0 %v521
      %548 = vmatprep.subr.mxu0 0.0
      %549 = vmatpush1.msra.mxu0 %v522
      %550 = vmatprep.subr.mxu0 0.0
      %551 = vmatpush1.msra.mxu0 %v523
      %552 = vmatprep.subr.mxu0 0.0
      %553 = vmatpush1.msra.mxu0 %v524
      %554 = vmatprep.subr.mxu0 0.0
      %555 = vmatpush1.msra.mxu0 %v525
      %556 = vmatprep.subr.mxu0 0.0
      %557 = vmatpush1.msra.mxu0 %v526
      %558 = vmatprep.subr.mxu0 0.0
      %559 = vmatpush1.msra.mxu0 %v527
      %560 = vmatprep.subr.mxu0 0.0
      %561 = vmatpush1.msra.mxu0 %v528
      %562 = vmatprep.subr.mxu0 0.0
      %563 = vmatpush1.msra.mxu0 %v529
      %564 = vmatprep.subr.mxu0 0.0
      %565 = vmatpush1.msra.mxu0 %v530
      %566 = vmatprep.subr.mxu0 0.0
      %567 = vmatpush1.msra.mxu0 %v531
      %568 = vmatprep.subr.mxu0 0.0
      %569 = vmatpush1.msra.mxu0 %v532
      %570 = vmatprep.subr.mxu0 0.0
      %571 = vmatpush1.msra.mxu0 0.0
      %572 = vmatprep.subr.mxu0 0.0
      %573 = vmatpush1.msra.mxu0 0.0
      %574 = vmatprep.subr.mxu0 0.0
      %575 = vmatpush1.msra.mxu0 0.0
      %576 = vmatprep.subr.mxu0 0.0
      %577 = vmatpush1.msra.mxu0 0.0
      %578 = vmatprep.subr.mxu0 0.0
      %579 = vmatpush1.msra.mxu0 0.0
      %580 = vmatprep.subr.mxu0 0.0
      %581 = vmatpush1.msra.mxu0 0.0
      %582 = vmatprep.subr.mxu0 0.0
      %583 = vmatpush1.msra.mxu0 0.0
      %584 = vmatprep.subr.mxu0 0.0
      %585 = vmatpush1.msra.mxu0 0.0
      %586 = vmatprep.subr.mxu0 0.0
      %587 = vmatpush1.msra.mxu0 0.0
      %588 = vmatprep.subr.mxu0 0.0
      %589 = vmatpush1.msra.mxu0 0.0
      %590 = vmatprep.subr.mxu0 0.0
      %591 = vmatpush1.msra.mxu0 0.0
      %592 = vmatprep.subr.mxu0 0.0
      %593 = vmatpush1.msra.mxu0 0.0
      %594 = vmatprep.subr.mxu0 0.0
      %595 = vmatpush1.msra.mxu0 0.0
      %596 = vmatprep.subr.mxu0 0.0
      %597 = vmatpush1.msra.mxu0 0.0
      %598 = vmatprep.subr.mxu0 0.0
      %599 = vmatpush1.msra.mxu0 0.0
      %600 = vmatprep.subr.mxu0 0.0
      %601 = vmatpush1.msra.mxu0 0.0
      %602 = vmatprep.mubr.f32.mxu0 0.0
      %603 = vmatmul.mubr.f32.gmra.mrb[0].mxu0 %v509
      %v604 = vpop.f32.mrb[0].mxu0
      %v605 = vadd.f32 %v537, %v604
      %v606 = vpop.f32.mrb[0].mxu0
      %607 = vmatprep.mubr.f32.mxu0 0.0
      %608 = vmatmul.mubr.f32.gmra.mrb[0].mxu0 %v510
      %v609 = vpop.f32.mrb[0].mxu0
      %v610 = vadd.f32 %v537, %v609
      %v611 = vpop.f32.mrb[0].mxu0
      %612 = vmatprep.mubr.f32.mxu0 0.0
      %613 = vmatmul.mubr.f32.gmra.mrb[0].mxu0 %v511
      %v614 = vpop.f32.mrb[0].mxu0
      %v615 = vadd.f32 %v537, %v614
      %v616 = vpop.f32.mrb[0].mxu0
      %617 = vmatprep.mubr.f32.mxu0 0.0
      %618 = vmatmul.mubr.f32.gmra.mrb[0].mxu0 %v512
      %v619 = vpop.f32.mrb[0].mxu0
      %v620 = vadd.f32 %v537, %v619
      %v621 = vpop.f32.mrb[0].mxu0
      %622 = vmatprep.mubr.f32.mxu0 0.0
      %623 = vmatmul.mubr.f32.gmra.mrb[0].mxu0 %v513
      %v624 = vpop.f32.mrb[0].mxu0
      %v625 = vadd.f32 %v537, %v624
      %v626 = vpop.f32.mrb[0].mxu0
      %627 = vmatprep.mubr.f32.mxu0 0.0
      %628 = vmatmul.mubr.f32.gmra.mrb[0].mxu0 %v514
      %v629 = vpop.f32.mrb[0].mxu0
      %v630 = vadd.f32 %v537, %v629
      %v631 = vpop.f32.mrb[0].mxu0
      %632 = vmatprep.mubr.f32.mxu0 0.0
      %633 = vmatmul.mubr.f32.gmra.mrb[0].mxu0 %v515
      %v634 = vpop.f32.mrb[0].mxu0
      %v635 = vadd.f32 %v537, %v634
      %v636 = vpop.f32.mrb[0].mxu0
      %637 = vmatprep.mubr.f32.mxu0 0.0
      %638 = vmatmul.mubr.f32.gmra.mrb[0].mxu0 %v516
      %v639 = vpop.f32.mrb[0].mxu0
      %v640 = vadd.f32 %v537, %v639
      %v641 = vpop.f32.mrb[0].mxu0
      %642 = vdwg.mxu0
      %vm643 = vcmask 31744
      %644 = vst.msk [vmem:[%s226] sm:$0xff] %vm643, %v605
      %645 = vst.msk [vmem:[%s226 + $0x8] sm:$0xff] %vm643, %v610
      %646 = vst.msk [vmem:[%s226 + $0x10] sm:$0xff] %vm643, %v615
      %647 = vst.msk [vmem:[%s226 + $0x18] sm:$0xff] %vm643, %v620
      %648 = vst.msk [vmem:[%s226 + $0x20] sm:$0xff] %vm643, %v625
      %649 = vst.msk [vmem:[%s226 + $0x28] sm:$0xff] %vm643, %v630
      %650 = vst.msk [vmem:[%s226 + $0x30] sm:$0xff] %vm643, %v635
      %651 = vst.msk [vmem:[%s226 + $0x38] sm:$0xff] %vm643, %v640
      %s652 = smul.u32 8, %s16
      %p653 = scmp.lt.s32.totalorder %s652, 31
      %s654 = scalar_select %p653, %s652, 31
      %s655 = smul.addr %s654, 8
      %s656 = scalar_lea.vmem %s5, %s655
      // Predicated region
      $region41: #{tpu_custom_call.1} parent=39 // pred_check
        %p657 = pneg %p144
      $region42: #{tpu_custom_call.1} parent=39 // pred_check_branch
        %659 = sbr.rel (%p657) target = $region44
      $region43: #{tpu_custom_call.1} parent=39 // pred_region
        %s660 = smul.u32 8, %s16
      $region44: #{tpu_custom_call.1} parent=39 // pred_fallthru
        _
    $region40: #{tpu_custom_call.1} parent=5 // pred_fallthru
      _
    %p661 = scmp.le.s32.totalorder 2, %s11
    // Predicated region
    $region45: #{tpu_custom_call.1} parent=5 // pred_check
      %p662 = pneg %p661
    $region46: #{tpu_custom_call.1} parent=5 // pred_check_branch
      %664 = sbr.rel (%p662) target = $region48
    $region47: #{tpu_custom_call.1} parent=5 // pred_region
      %s665 = ssub.s32 %s11, 2
      // Predicated region
      $region49: #{tpu_custom_call.1} parent=47 // pred_check
        %p666 = pneg %p150
      $region50: #{tpu_custom_call.1} parent=47 // pred_check_branch
        %668 = sbr.rel (%p666) target = $region52
      $region51: #{tpu_custom_call.1} parent=47 // pred_region
        %s669 = smul.u32 8, %s17
        %p670 = scmp.lt.s32.totalorder %s669, 31
        %s671 = scalar_select %p670, %s669, 31
        %s672 = smul.addr %s671, 8
        %s673 = scalar_lea.vmem %s5, %s672
      $region52: #{tpu_custom_call.1} parent=47 // pred_fallthru
        _
    $region48: #{tpu_custom_call.1} parent=5 // pred_fallthru
      _
  $region6: #{tpu_custom_call.1} parent=0 // loop_footer
    %s15 = sadd.s32 1, %s11
  $region7: #{tpu_custom_call.1} parent=0 // loop_footer_branch
    %10 = sbr.rel target = $region3
  $region8: #{tpu_custom_call.1} parent=0 // loop_exit
    _

</llo_original>
